<compile_context>
chip_gen: v5e
topology: v5e:2x2
jax: 0.10.0
libtpu: 0.0.40
codegen_flags: <defaults>
</compile_context>

<pallas_src>
import functools

import jax
import jax.numpy as jnp
from jax.experimental import pallas as pl
from jax.experimental.pallas import tpu as pltpu

_LANE = 128
_SUBLANE = 8
_MAX_TILE_ROWS = 2048   # 2048x128 f32 = 1 MiB / input block; v7x-safe.
_NUM_CORES = 2          # leading "parallel" axis (2 TCs on v7x; near-free loop
                        # on 1-TC chips: same total block count either way).
# TODO(synk): on v7x, verify in a profile that the size-2 "parallel" axis is
# actually sharded across both TensorCores; if not, switch to CORE_PARALLEL.


def _cdiv(a, b):
    return (a + b - 1) // b


def _round_up(a, b):
    return _cdiv(a, b) * b


def _focal_kernel(p_ref, t_ref, out_ref, *, alpha, gamma, rows, tile_rows,
                  nb, blocks_per_core, has_partial, has_dup):
    """One grid step: focal loss on a (tile_rows, 128) tile, accumulated into a
    per-core resident (1, 2, 8, 128) output block (plane 0: loss, 1: #pos)."""
    c = pl.program_id(0)
    j = pl.program_id(1)
    raw = c * blocks_per_core + j          # un-clamped global block index

    # Output block index depends only on the core axis -> resident in VMEM
    # across the "arbitrary" axis; zero it on each core's first step.
    @pl.when(j == 0)
    def _init():
        out_ref[...] = jnp.zeros_like(out_ref)

    p = jnp.clip(p_ref[...].astype(jnp.float32), 1e-8, 1.0 - 1e-8)
    one_m_p = 1.0 - p
    log_p = jnp.log(p)          # EUP
    log_1mp = jnp.log(one_m_p)  # EUP
    if gamma == 2.0:
        pos_w = one_m_p * one_m_p          # (1-p)^2 without extra EUP ops
        neg_w = p * p                      # p^2
    else:
        pos_w = jnp.exp(gamma * log_1mp)   # (1-p)^gamma, reuse log(1-p)
        neg_w = jnp.exp(gamma * log_p)     # p^gamma,     reuse log(p)
    pos_l = (-alpha) * log_p * pos_w
    neg_l = (-(1.0 - alpha)) * log_1mp * neg_w

    pos_b = t_ref[...] == 1                # native target dtype, no cast pass
    loss = jnp.where(pos_b, pos_l, neg_l)  # single select in the fast path
    pos_f = pos_b.astype(jnp.float32)

    n_grp = tile_rows // _SUBLANE

    def _accum(l_v, p_v):
        # VPU-only accumulation: fold sublane groups of 8 (aligned with the
        # native (8,128) vreg tiling -> layout-free reshape) into the resident
        # output block. No XLU reduce / scalar store in the hot loop.
        out_ref[0, 0] += l_v.reshape(n_grp, _SUBLANE, _LANE).sum(axis=0)
        out_ref[0, 1] += p_v.reshape(n_grp, _SUBLANE, _LANE).sum(axis=0)

    if not (has_partial or has_dup):
        # Fully tiled problem: every block is interior, no masking at all.
        _accum(loss, pos_f)
    else:
        fast_bound = nb - 1 if has_partial else nb

        @pl.when(raw < fast_bound)
        def _fast():
            _accum(loss, pos_f)

        if has_partial:
            # Only the single boundary block pays for the row-validity mask.
            @pl.when(raw == nb - 1)
            def _boundary():
                valid_rows = rows - (nb - 1) * tile_rows   # static Python int
                rid = jax.lax.broadcasted_iota(
                    jnp.int32, (tile_rows, _LANE), 0)
                rmask = rid < valid_rows
                _accum(jnp.where(rmask, loss, 0.0),
                       jnp.where(rmask, pos_f, 0.0))
        # Duplicate step (raw >= nb, at most one): falls through both whens,
        # contributes nothing.


def focal_loss(preds, targets, alpha=0.25, gamma=2.0):
    """Pallas implementation of FocalLoss.forward.

    preds, targets: arrays of identical shape (any rank; e.g. NCHW).
    Returns a scalar float32 loss.
    """
    assert preds.shape == targets.shape
    total = int(preds.size)

    # Row count of the (rows, 128) view; keep at least 8 rows so the block's
    # sublane dim stays legal even for tiny inputs.
    rows = max(_cdiv(total, _LANE), _SUBLANE)
    pad = rows * _LANE - total

    flat_p = preds.reshape(-1)
    flat_t = targets.reshape(-1)
    if pad:
        # <=127 elements (<=1023 only for sub-1024-element inputs). Pad values
        # are benign: preds=0 clamps to 1e-8 (neg loss ~7.5e-25 each, far
        # below tolerance), targets=0 is never positive -> no mask needed.
        flat_p = jnp.pad(flat_p, (0, pad), constant_values=0.0)
        flat_t = jnp.pad(flat_t, (0, pad), constant_values=0.0)

    p2 = flat_p.reshape(rows, _LANE)
    t2 = flat_t.reshape(rows, _LANE)

    tile_rows = min(_MAX_TILE_ROWS,
                    _round_up(max(_cdiv(rows, _NUM_CORES), 1), _SUBLANE))
    nb = _cdiv(rows, tile_rows)                    # real blocks (last may be partial)
    blocks_per_core = _cdiv(nb, _NUM_CORES)
    has_partial = (rows % tile_rows) != 0
    has_dup = (_NUM_CORES * blocks_per_core) != nb  # at most one extra step

    if has_dup:
        # Clamp the (single) surplus grid step onto the last real block so no
        # DMA window ever starts past the array; the kernel skips its math.
        def in_map(c, j):
            return (jnp.minimum(c * blocks_per_core + j, nb - 1), 0)
    else:
        def in_map(c, j):
            return (c * blocks_per_core + j, 0)

    in_spec = pl.BlockSpec((tile_rows, _LANE), in_map)
    out_spec = pl.BlockSpec((1, 2, _SUBLANE, _LANE), lambda c, j: (c, 0, 0, 0))

    kernel = functools.partial(
        _focal_kernel, alpha=float(alpha), gamma=float(gamma),
        rows=rows, tile_rows=tile_rows, nb=nb,
        blocks_per_core=blocks_per_core,
        has_partial=has_partial, has_dup=has_dup)

    partials = pl.pallas_call(
        kernel,
        out_shape=jax.ShapeDtypeStruct((_NUM_CORES, 2, _SUBLANE, _LANE),
                                       jnp.float32),
        grid_spec=pltpu.PrefetchScalarGridSpec(
            num_scalar_prefetch=0,
            grid=(_NUM_CORES, blocks_per_core),
            in_specs=[in_spec, in_spec],
            out_specs=out_spec,
        ),
        compiler_params=pltpu.CompilerParams(
            dimension_semantics=("parallel", "arbitrary"),
            # Actual use is ~6-10 MiB at 2048-row tiles; raise the scoped
            # limit explicitly (v5e defaults to 16 MiB) with v7x headroom.
            vmem_limit_bytes=64 * 1024 * 1024),
    )(p2, t2)

    # Tiny final combine in XLA (2 x 2 x 8 x 128 floats).
    loss_sum = jnp.sum(partials[:, 0])
    pos_num = jnp.maximum(jnp.sum(partials[:, 1]), 1.0)
    return (loss_sum / pos_num).astype(jnp.float32)


def _focal_loss_ref(preds, targets, alpha=0.25, gamma=2.0):
    """Pure-JAX reference mirroring the PyTorch module."""
    pos_mask = (targets == 1.0).astype(jnp.float32)
    pos_num = jnp.maximum(pos_mask.sum(), 1.0)
    p = jnp.clip(preds.astype(jnp.float32), 1e-8, 1.0 - 1e-8)
    pos_l = -jnp.log(p) * jnp.power(1.0 - p, gamma) * alpha
    neg_l = -jnp.log(1.0 - p) * jnp.power(p, gamma) * (1.0 - alpha)
    loss = jnp.where(pos_mask > 0.0, pos_l, neg_l)
    return loss.sum() / pos_num


if __name__ == "__main__":
    key = jax.random.PRNGKey(0)
    k1, k2, k3, k4, k5, k6 = jax.random.split(key, 6)

    # Primary: detection-head-like (B, C, H, W) NCHW sigmoid scores.
    # 2*4*16*16 = 2048 elements -> lane-aligned, zero padding, fast path only.
    B, C, H, W = 2, 4, 16, 16
    preds = jax.nn.sigmoid(jax.random.normal(k1, (B, C, H, W), jnp.float32))
    targets = (jax.random.uniform(k2, (B, C, H, W)) > 0.95).astype(jnp.float32)
    out = jax.block_until_ready(focal_loss(preds, targets))
    ref = _focal_loss_ref(preds, targets)
    assert jnp.allclose(out, ref, rtol=1e-5, atol=1e-6), (out, ref)

    # Rows not divisible by the tile: exercises the gated boundary-block mask
    # (still no lane padding: 2*4*17*16 = 2176 = 17*128).
    preds2 = jax.nn.sigmoid(jax.random.normal(k3, (2, 4, 17, 16), jnp.float32))
    targets2 = (jax.random.uniform(k4, (2, 4, 17, 16)) > 0.95).astype(jnp.float32)
    out2 = jax.block_until_ready(focal_loss(preds2, targets2))
    ref2 = _focal_loss_ref(preds2, targets2)
    assert jnp.allclose(out2, ref2, rtol=1e-5, atol=1e-6), (out2, ref2)

    # Tiny non-128-divisible input: exercises benign lane/row padding and the
    # duplicate-grid-step skip from the 2-way core split.
    preds3 = jax.nn.sigmoid(jax.random.normal(k5, (1, 4, 5, 7), jnp.float32))
    targets3 = (jax.random.uniform(k6, (1, 4, 5, 7)) > 0.9).astype(jnp.float32)
    out3 = jax.block_until_ready(focal_loss(preds3, targets3))
    ref3 = _focal_loss_ref(preds3, targets3)
    assert jnp.allclose(out3, ref3, rtol=1e-5, atol=1e-6), (out3, ref3)

    # TODO(synk): the PyTorch forward's debug print() calls (cls_max/cls_min/
    # cls_num) are intentionally omitted; they don't affect the returned loss.
    print("KERNEL_OK")
</pallas_src>

<mosaic_0001>
module attributes {stable_mosaic.version = 11 : i64} {
  func.func @_focal_kernel(%arg0: i32, %arg1: i32, %arg2: memref<8x128xf32, #tpu.memory_space<vmem>>, %arg3: memref<8x128xf32, #tpu.memory_space<vmem>>, %arg4: memref<1x2x8x128xf32, #tpu.memory_space<vmem>>) attributes {dimension_semantics = [#tpu.dimension_semantics<parallel>, #tpu.dimension_semantics<arbitrary>], iteration_bounds = array<i64: 2, 1>, scalar_prefetch = 0 : i64, scratch_operands = 0 : i64, tpu.core_type = #tpu.core_type<tc>, window_params = [{transform_indices = @transform_0, window_bounds = array<i64: 8, 128>}, {transform_indices = @transform_1, window_bounds = array<i64: 8, 128>}, {transform_indices = @transform_2, window_bounds = array<i64: 1, 2, 8, 128>}]} {
    %c0_i32 = arith.constant 0 : i32
    %0 = arith.cmpi eq, %arg1, %c0_i32 : i32
    %1 = arith.extui %0 : i1 to i32
    %c0_i32_0 = arith.constant 0 : i32
    %2 = arith.cmpi ne, %1, %c0_i32_0 : i32
    scf.if %2 {
      %cst_26 = arith.constant 0.000000e+00 : f32
      %42 = vector.broadcast %cst_26 : f32 to vector<1x2x8x128xf32>
      %c0_27 = arith.constant 0 : index
      %c0_28 = arith.constant 0 : index
      %c0_29 = arith.constant 0 : index
      %c0_30 = arith.constant 0 : index
      %43 = vector.load %arg4[%c0_27, %c0_28, %c0_29, %c0_30] : memref<1x2x8x128xf32, #tpu.memory_space<vmem>>, vector<1x2x8x128xf32>
      tpu.vector_store %arg4[%c0_27, %c0_28, %c0_29, %c0_30], %42 {strides = array<i32>} : memref<1x2x8x128xf32, #tpu.memory_space<vmem>>, vector<1x2x8x128xf32>,
    } else {
    }
    %c0 = arith.constant 0 : index
    %c0_1 = arith.constant 0 : index
    %3 = vector.load %arg2[%c0, %c0_1] : memref<8x128xf32, #tpu.memory_space<vmem>>, vector<8x128xf32>
    %cst = arith.constant 9.99999993E-9 : f32
    %cst_2 = arith.constant 1.000000e+00 : f32
    %4 = vector.broadcast %cst : f32 to vector<8x128xf32>
    %5 = arith.maximumf %4, %3 : vector<8x128xf32>
    %6 = vector.broadcast %cst_2 : f32 to vector<8x128xf32>
    %7 = arith.minimumf %6, %5 : vector<8x128xf32>
    %cst_3 = arith.constant 1.000000e+00 : f32
    %8 = vector.broadcast %cst_3 : f32 to vector<8x128xf32>
    %9 = arith.subf %8, %7 : vector<8x128xf32>
    %10 = math.log %7 : vector<8x128xf32>
    %11 = math.log %9 : vector<8x128xf32>
    %12 = arith.mulf %9, %9 : vector<8x128xf32>
    %13 = arith.mulf %7, %7 : vector<8x128xf32>
    %cst_4 = arith.constant -2.500000e-01 : f32
    %14 = vector.broadcast %cst_4 : f32 to vector<8x128xf32>
    %15 = arith.mulf %14, %10 : vector<8x128xf32>
    %16 = arith.mulf %15, %12 : vector<8x128xf32>
    %cst_5 = arith.constant -7.500000e-01 : f32
    %17 = vector.broadcast %cst_5 : f32 to vector<8x128xf32>
    %18 = arith.mulf %17, %11 : vector<8x128xf32>
    %19 = arith.mulf %18, %13 : vector<8x128xf32>
    %c0_6 = arith.constant 0 : index
    %c0_7 = arith.constant 0 : index
    %20 = vector.load %arg3[%c0_6, %c0_7] : memref<8x128xf32, #tpu.memory_space<vmem>>, vector<8x128xf32>
    %cst_8 = arith.constant 1.000000e+00 : f32
    %21 = vector.broadcast %cst_8 : f32 to vector<8x128xf32>
    %22 = arith.cmpf oeq, %20, %21 : vector<8x128xf32>
    %23 = arith.select %22, %16, %19 : vector<8x128xi1>, vector<8x128xf32>
    %24 = arith.extui %22 : vector<8x128xi1> to vector<8x128xi32>
    %25 = arith.sitofp %24 : vector<8x128xi32> to vector<8x128xf32>
    %c0_9 = arith.constant 0 : index
    %c0_10 = arith.constant 0 : index
    %c0_11 = arith.constant 0 : index
    %c0_12 = arith.constant 0 : index
    %26 = vector.load %arg4[%c0_9, %c0_10, %c0_11, %c0_12] : memref<1x2x8x128xf32, #tpu.memory_space<vmem>>, vector<1x1x8x128xf32>
    %27 = vector.shape_cast %26 : vector<1x1x8x128xf32> to vector<8x128xf32>
    %28 = vector.shape_cast %23 : vector<8x128xf32> to vector<1x8x128xf32>
    %cst_13 = arith.constant dense<0.000000e+00> : vector<8x128xf32>
    %29 = vector.multi_reduction <add>, %28, %cst_13 [0] : vector<1x8x128xf32> to vector<8x128xf32>
    %30 = arith.addf %27, %29 : vector<8x128xf32>
    %c0_14 = arith.constant 0 : index
    %c0_15 = arith.constant 0 : index
    %c0_16 = arith.constant 0 : index
    %c0_17 = arith.constant 0 : index
    %31 = vector.load %arg4[%c0_14, %c0_15, %c0_16, %c0_17] : memref<1x2x8x128xf32, #tpu.memory_space<vmem>>, vector<1x1x8x128xf32>
    %32 = vector.shape_cast %31 : vector<1x1x8x128xf32> to vector<8x128xf32>
    %33 = vector.shape_cast %30 : vector<8x128xf32> to vector<1x1x8x128xf32>
    tpu.vector_store %arg4[%c0_14, %c0_15, %c0_16, %c0_17], %33 {strides = array<i32>} : memref<1x2x8x128xf32, #tpu.memory_space<vmem>>, vector<1x1x8x128xf32>,
    %c0_18 = arith.constant 0 : index
    %c1 = arith.constant 1 : index
    %c0_19 = arith.constant 0 : index
    %c0_20 = arith.constant 0 : index
    %34 = vector.load %arg4[%c0_18, %c1, %c0_19, %c0_20] : memref<1x2x8x128xf32, #tpu.memory_space<vmem>>, vector<1x1x8x128xf32>
    %35 = vector.shape_cast %34 : vector<1x1x8x128xf32> to vector<8x128xf32>
    %36 = vector.shape_cast %25 : vector<8x128xf32> to vector<1x8x128xf32>
    %cst_21 = arith.constant dense<0.000000e+00> : vector<8x128xf32>
    %37 = vector.multi_reduction <add>, %36, %cst_21 [0] : vector<1x8x128xf32> to vector<8x128xf32>
    %38 = arith.addf %35, %37 : vector<8x128xf32>
    %c0_22 = arith.constant 0 : index
    %c1_23 = arith.constant 1 : index
    %c0_24 = arith.constant 0 : index
    %c0_25 = arith.constant 0 : index
    %39 = vector.load %arg4[%c0_22, %c1_23, %c0_24, %c0_25] : memref<1x2x8x128xf32, #tpu.memory_space<vmem>>, vector<1x1x8x128xf32>
    %40 = vector.shape_cast %39 : vector<1x1x8x128xf32> to vector<8x128xf32>
    %41 = vector.shape_cast %38 : vector<8x128xf32> to vector<1x1x8x128xf32>
    tpu.vector_store %arg4[%c0_22, %c1_23, %c0_24, %c0_25], %41 {strides = array<i32>} : memref<1x2x8x128xf32, #tpu.memory_space<vmem>>, vector<1x1x8x128xf32>,
    return
  }
  func.func @transform_0(%arg0: i32, %arg1: i32) -> (i32, i32) {
    %c1_i32 = arith.constant 1 : i32
    %0 = arith.muli %arg0, %c1_i32 : i32
    %1 = arith.addi %0, %arg1 : i32
    %c0_i32 = arith.constant 0 : i32
    %c0_i32_0 = arith.constant 0 : i32
    return %1, %c0_i32 : i32, i32
  }
  func.func @transform_1(%arg0: i32, %arg1: i32) -> (i32, i32) {
    %c1_i32 = arith.constant 1 : i32
    %0 = arith.muli %arg0, %c1_i32 : i32
    %1 = arith.addi %0, %arg1 : i32
    %c0_i32 = arith.constant 0 : i32
    %c0_i32_0 = arith.constant 0 : i32
    return %1, %c0_i32 : i32, i32
  }
  func.func @transform_2(%arg0: i32, %arg1: i32) -> (i32, i32, i32, i32) {
    %c0_i32 = arith.constant 0 : i32
    %c0_i32_0 = arith.constant 0 : i32
    %c0_i32_1 = arith.constant 0 : i32
    %c0_i32_2 = arith.constant 0 : i32
    return %arg0, %c0_i32, %c0_i32_0, %c0_i32_1 : i32, i32, i32, i32
  }
}

</mosaic_0001>

<llo_original>
// kernel: tpu_custom_call.1
$region0: #{tpu_custom_call.1}
  #allocation0 [shape = 'u32[]', space=smem, size = 0x4, offset = 0x4, fixed_abs, tag = 'smem constant byte address 0x4 - core index']
  #allocation1 [shape = 'u32[72,128]{1,0:T(1,128)}', space=vmem, size = 0x9000, scoped, tag = 'internal scratch']
  %s0 = inlined_call_operand.hbm [shape: f32[16,128], index: 0, kind: input, shape index: {}]
  %s1 = inlined_call_operand.hbm [shape: f32[16,128], index: 1, kind: input, shape index: {}]
  %s2 = inlined_call_operand.hbm [shape: f32[2,2,8,128], index: 2, kind: output, shape index: {}]
  %s3 = sld [smem:[#allocation0]]
  $region53: #{tpu_custom_call.1} parent=0
    _
  %s5 = ssub.s32 1, %s3
  %s6 = scalar_select 0, %s5, %s3
  $region1: #{tpu_custom_call.1} parent=0
    #allocation2 [shape = 'u8[8192]{0}', space=vmem, size = 0x2000, scoped, tag = 'input window, operand 0']
    #allocation3 [shape = 's32[2]{0}', space=sflag, size = 0x8, scoped, tag = 'scoped memory for tpu_custom_call.1']
    #allocation4 [shape = 's32[2]{0}', space=sflag, size = 0x8, scoped, tag = 'scoped memory for tpu_custom_call.1']
    #allocation5 [shape = 'u8[8192]{0}', space=vmem, size = 0x2000, scoped, tag = 'input window, operand 1']
    #allocation6 [shape = 's32[2]{0}', space=sflag, size = 0x8, scoped, tag = 'scoped memory for tpu_custom_call.1']
    #allocation7 [shape = 'u8[16384]{0}', space=vmem, size = 0x4000, scoped, tag = 'output window, operand 0']
    %7 = vsyncpa [#allocation3], 0
    %s8 = scalar_lea.sflag [#allocation3], 1
    %9 = vsyncpa %s8, 0
    %10 = vsyncpa [#allocation6], 0
    %s11 = scalar_lea.sflag [#allocation6], 1
    %12 = vsyncpa %s11, 0
    %13 = vsyncpa [#allocation4], 0
    %s14 = scalar_lea.sflag [#allocation4], 1
    %15 = vsyncpa %s14, 0
    loop: start=0, step=1, limit=4
    $region2: #{tpu_custom_call.1} parent=1 // loop_pre_header
      _
    $region3: #{tpu_custom_call.1} parent=1 // loop_header
      %s17 = sphi 0, %s21
      %p18 = scmp.ge.s32.totalorder %s17, 4
      %s24 = sphi 0, %s36
      %s25 = sphi 0, %s32
      %s26 = sphi 0, %s24
      %s27 = sphi 0, %s25
      %s28 = sphi 0, %s26
      %s29 = sphi 0, %s27
      %s41 = sphi 0, %s43
      %s44 = sphi 0, %s41
      %s45 = sphi 0, %s44
      %s61 = sphi 0, %s45
      %s69 = sphi 0, %s71
      %s72 = sphi 0, %s69
      %s73 = sphi 0, %s72
      %s89 = sphi 0, %s73
      %s95 = sphi 0, %s97
      %s98 = sphi 0, %s95
      %s99 = sphi 0, %s98
      %s115 = sphi 0, %s99
    $region4: #{tpu_custom_call.1} parent=1 // loop_header_branch
      %20 = sbr.rel (%p18) target = $region8
    $region5: #{tpu_custom_call.1} parent=1 // loop_body
      %s22 = ssub.s32 %s17, 1
      %s23 = ssub.s32 %s17, 2
      %s30 = sadd.s32 1, %s25
      %p31 = scmp.ge.s32.totalorder %s30, 1
      %s32 = scalar_select %p31, 0, %s30
      %s33 = sadd.s32 1, %s24
      %s34 = scalar_select %p31, %s33, %s24
      %p35 = scmp.ge.s32.totalorder %s34, 2
      %s36 = scalar_select %p35, 0, %s34
      %s37 = sadd.s32 %s24, %s25
      %s38 = sadd.s32 %s36, %s32
      %s39 = ssub.s32 %s37, %s38
      %p40 = scmp.eq.s32.totalorder %s39, 0
      %s42 = sadd.s32 %s41, 1
      %s43 = scalar_select %p40, %s41, %s42
      %p46 = pneg %p40
      %p47 = scmp.eq.s32.totalorder %s17, 1
      %p48 = por %p46, %p47
      %p49 = scmp.ne.s32.totalorder %s41, %s44
      %p50 = scmp.eq.s32.totalorder %s17, 0
      %p51 = por %p49, %p50
      %p52 = scmp.ne.s32.totalorder %s41, %s44
      %p53 = scmp.eq.s32.totalorder %s22, 1
      %p54 = por %p52, %p53
      %p55 = scmp.ne.s32.totalorder %s44, %s45
      %p56 = scmp.eq.s32.totalorder %s22, 0
      %p57 = por %p55, %p56
      %p58 = scmp.ne.s32.totalorder %s44, %s45
      %p59 = scmp.eq.s32.totalorder %s23, 1
      %p60 = por %p58, %p59
      %p62 = scmp.ne.s32.totalorder %s45, %s61
      %p63 = scmp.eq.s32.totalorder %s23, 0
      %p64 = por %p62, %p63
      %s65 = sadd.s32 %s24, %s25
      %s66 = sadd.s32 %s36, %s32
      %s67 = ssub.s32 %s65, %s66
      %p68 = scmp.eq.s32.totalorder %s67, 0
      %s70 = sadd.s32 %s69, 1
      %s71 = scalar_select %p68, %s69, %s70
      %p74 = pneg %p68
      %p75 = scmp.eq.s32.totalorder %s17, 1
      %p76 = por %p74, %p75
      %p77 = scmp.ne.s32.totalorder %s69, %s72
      %p78 = scmp.eq.s32.totalorder %s17, 0
      %p79 = por %p77, %p78
      %p80 = scmp.ne.s32.totalorder %s69, %s72
      %p81 = scmp.eq.s32.totalorder %s22, 1
      %p82 = por %p80, %p81
      %p83 = scmp.ne.s32.totalorder %s72, %s73
      %p84 = scmp.eq.s32.totalorder %s22, 0
      %p85 = por %p83, %p84
      %p86 = scmp.ne.s32.totalorder %s72, %s73
      %p87 = scmp.eq.s32.totalorder %s23, 1
      %p88 = por %p86, %p87
      %p90 = scmp.ne.s32.totalorder %s73, %s89
      %p91 = scmp.eq.s32.totalorder %s23, 0
      %p92 = por %p90, %p91
      %s93 = ssub.s32 %s24, %s36
      %p94 = scmp.eq.s32.totalorder %s93, 0
      %s96 = sadd.s32 %s95, 1
      %s97 = scalar_select %p94, %s95, %s96
      %p100 = pneg %p94
      %p101 = scmp.eq.s32.totalorder %s17, 1
      %p102 = por %p100, %p101
      %p103 = scmp.ne.s32.totalorder %s95, %s98
      %p104 = scmp.eq.s32.totalorder %s17, 0
      %p105 = por %p103, %p104
      %p106 = scmp.ne.s32.totalorder %s95, %s98
      %p107 = scmp.eq.s32.totalorder %s22, 1
      %p108 = por %p106, %p107
      %p109 = scmp.ne.s32.totalorder %s98, %s99
      %p110 = scmp.eq.s32.totalorder %s22, 0
      %p111 = por %p109, %p110
      %p112 = scmp.ne.s32.totalorder %s98, %s99
      %p113 = scmp.eq.s32.totalorder %s23, 1
      %p114 = por %p112, %p113
      %p116 = scmp.ne.s32.totalorder %s99, %s115
      %p117 = scmp.eq.s32.totalorder %s23, 0
      %p118 = por %p116, %p117
      %p119 = scmp.le.s32.totalorder 1, %s17
      %p120 = scmp.lt.s32.totalorder %s17, 3
      %p121 = pnand %p119, %p120
      %p122 = pneg %p121
      // Predicated region
      $region9: #{tpu_custom_call.1} parent=5 // pred_check
        _
      $region10: #{tpu_custom_call.1} parent=5 // pred_check_branch
        %124 = sbr.rel (%p121) target = $region12
      $region11: #{tpu_custom_call.1} parent=5 // pred_region
        %s125 = ssub.s32 %s17, 1
      $region12: #{tpu_custom_call.1} parent=5 // pred_fallthru
        _
      %p126 = scmp.lt.s32.totalorder %s17, 2
      // Predicated region
      $region13: #{tpu_custom_call.1} parent=5 // pred_check
        %p127 = pneg %p126
      $region14: #{tpu_custom_call.1} parent=5 // pred_check_branch
        %129 = sbr.rel (%p127) target = $region16
      $region15: #{tpu_custom_call.1} parent=5 // pred_region
        // Predicated region
        $region17: #{tpu_custom_call.1} parent=15 // pred_check
          %p130 = pneg %p51
        $region18: #{tpu_custom_call.1} parent=15 // pred_check_branch
          %132 = sbr.rel (%p130) target = $region20
        $region19: #{tpu_custom_call.1} parent=15 // pred_region
          %s133 = sand.u32 %s41, 1
          %s134 = scalar_lea.sflag [#allocation3], %s133
          %s135 = sand.u32 %s41, 1
          %s136 = smul.addr %s135, 8
          %s137 = scalar_lea.vmem [#allocation2], %s136
          %s138 = sadd.s32 %s24, %s25
          %140 = vsyncadd %s134, 0
          %s141 = smul.addr %s138, 8
          %s142 = scalar_lea.hbm %s0, %s141
          %s144 = sshll.u32 %s142, 4
          %s145 = int_to_ptr.hbm [resolvable:$true] %s144
          %s146 = sshll.u32 %s137, 4
          %s147 = int_to_ptr.vmem [resolvable:$true] %s146
          %149 = dma.hbm_to_vmem [thread:$0]  %s145, 128, %s147, %s134
        $region20: #{tpu_custom_call.1} parent=15 // pred_fallthru
          _
        // Predicated region
        $region21: #{tpu_custom_call.1} parent=15 // pred_check
          %p150 = pneg %p79
        $region22: #{tpu_custom_call.1} parent=15 // pred_check_branch
          %152 = sbr.rel (%p150) target = $region24
        $region23: #{tpu_custom_call.1} parent=15 // pred_region
          %s153 = sand.u32 %s69, 1
          %s154 = scalar_lea.sflag [#allocation6], %s153
          %s155 = sand.u32 %s69, 1
          %s156 = smul.addr %s155, 8
          %s157 = scalar_lea.vmem [#allocation5], %s156
          %s158 = sadd.s32 %s24, %s25
          %160 = vsyncadd %s154, 0
          %s161 = smul.addr %s158, 8
          %s162 = scalar_lea.hbm %s1, %s161
          %s164 = sshll.u32 %s162, 4
          %s165 = int_to_ptr.hbm [resolvable:$true] %s164
          %s166 = sshll.u32 %s157, 4
          %s167 = int_to_ptr.vmem [resolvable:$true] %s166
          %169 = dma.hbm_to_vmem [thread:$0]  %s165, 128, %s167, %s154
        $region24: #{tpu_custom_call.1} parent=15 // pred_fallthru
          _
      $region16: #{tpu_custom_call.1} parent=5 // pred_fallthru
        _
      %p170 = scmp.le.s32.totalorder 1, %s17
      %p171 = scmp.lt.s32.totalorder %s17, 3
      %p172 = pnand %p170, %p171
      %p173 = pneg %p172
      // Predicated region
      $region25: #{tpu_custom_call.1} parent=5 // pred_check
        _
      $region26: #{tpu_custom_call.1} parent=5 // pred_check_branch
        %175 = sbr.rel (%p172) target = $region28
      $region27: #{tpu_custom_call.1} parent=5 // pred_region
        %s176 = ssub.s32 %s17, 1
        %s177 = sand.u32 %s44, 1
        %s178 = scalar_lea.sflag [#allocation3], %s177
        %s179 = sand.u32 %s44, 1
        %s180 = smul.addr %s179, 8
        %s181 = scalar_lea.vmem [#allocation2], %s180
        // Predicated region
        $region29: #{tpu_custom_call.1} parent=27 // pred_check
          %p182 = pneg %p57
        $region30: #{tpu_custom_call.1} parent=27 // pred_check_branch
          %184 = sbr.rel (%p182) target = $region32
        $region31: #{tpu_custom_call.1} parent=27 // pred_region
          %186 = dma.done %s178, 128
        $region32: #{tpu_custom_call.1} parent=27 // pred_fallthru
          _
        %s187 = sand.u32 %s72, 1
        %s188 = scalar_lea.sflag [#allocation6], %s187
        %s189 = sand.u32 %s72, 1
        %s190 = smul.addr %s189, 8
        %s191 = scalar_lea.vmem [#allocation5], %s190
        // Predicated region
        $region33: #{tpu_custom_call.1} parent=27 // pred_check
          %p192 = pneg %p85
        $region34: #{tpu_custom_call.1} parent=27 // pred_check_branch
          %194 = sbr.rel (%p192) target = $region36
        $region35: #{tpu_custom_call.1} parent=27 // pred_region
          %196 = dma.done %s188, 128
        $region36: #{tpu_custom_call.1} parent=27 // pred_fallthru
          _
        %s197 = sand.u32 %s44, 1
        %s198 = scalar_lea.sflag [#allocation3], %s197
        %s199 = sand.u32 %s44, 1
        %s200 = smul.addr %s199, 8
        %s201 = scalar_lea.vmem [#allocation2], %s200
        %p202 = pneg %p57
        %p203 = pneg %p54
        %s204 = sand.u32 %s72, 1
        %s205 = scalar_lea.sflag [#allocation6], %s204
        %s206 = sand.u32 %s72, 1
        %s207 = smul.addr %s206, 8
        %s208 = scalar_lea.vmem [#allocation5], %s207
        %p209 = pneg %p85
        %p210 = pneg %p82
        %p211 = pneg %p111
        %p212 = pneg %p108
        %s213 = sand.u32 %s98, 1
        %s214 = scalar_lea.sflag [#allocation4], %s213
        %s215 = sand.u32 %s98, 1
        %s216 = smul.addr %s215, 16
        %s217 = scalar_lea.vmem [#allocation7], %s216
        %s218 = sadd.s32 %s26, %s27
        %s219 = sadd.s32 %s26, %s27
        %p220 = scmp.eq.s32.totalorder %s27, 0
        // Predicated region
        $region37: #{tpu_custom_call.1} parent=27 // pred_check
          %p221 = pneg %p220
        $region38: #{tpu_custom_call.1} parent=27 // pred_check_branch
          %223 = sbr.rel (%p221) target = $region40
        $region39: #{tpu_custom_call.1} parent=27 // pred_region
          %224 = vst [vmem:[%s217] sm:$0xff] 0.0
          %225 = vst [vmem:[%s217 + $0x8] sm:$0xff] 0.0
        $region40: #{tpu_custom_call.1} parent=27 // pred_fallthru
          _
        %v226 = vld [vmem:[%s181] sm:$0xff]
        %v227 = vmax.f32 %v226, 1e-08
        %v228 = vmin.f32 %v227, 1.0
        %v229 = vsub.f32 1.0, %v228
        %v230 = vlog2.pop %v228
        %v231 = vmul.f32 %v230, 0.6931472
        %v232 = vlog2.pop %v229
        %v233 = vmul.f32 %v232, 0.6931472
        %v234 = vmul.f32 %v229, %v229
        %v235 = vmul.f32 %v228, %v228
        %v236 = vmul.f32 %v231, -0.25
        %v237 = vmul.f32 %v236, %v234
        %v238 = vmul.f32 %v233, -0.75
        %v239 = vmul.f32 %v238, %v235
        %v240 = vld [vmem:[%s191] sm:$0xff]
        %vm241 = vcmp.eq.f32.partialorder %v240, 1.0
        %v242 = vsel %vm241, %v237, %v239
        %v243 = vsel %vm241, 1, 0
        %v244 = vcvt.s32.f32 %v243
        %v245 = vld [vmem:[%s217] sm:$0xff]
        %v246 = vadd.f32 %v242, 0.0
        %v247 = vadd.f32 %v245, %v246
        %248 = vst [vmem:[%s217] sm:$0xff] %v247
        %s249 = scalar_lea.vmem %s217, 8 [#allocation7]
        %v250 = vld [vmem:[%s249] sm:$0xff]
        %v251 = vadd.f32 %v244, 0.0
        %v252 = vadd.f32 %v250, %v251
        %253 = vst [vmem:[%s249] sm:$0xff] %v252
        %s254 = sand.u32 %s98, 1
        %s255 = scalar_lea.sflag [#allocation4], %s254
        %s256 = sand.u32 %s98, 1
        %s257 = smul.addr %s256, 16
        %s258 = scalar_lea.vmem [#allocation7], %s257
        // Predicated region
        $region41: #{tpu_custom_call.1} parent=27 // pred_check
          %p259 = pneg %p108
        $region42: #{tpu_custom_call.1} parent=27 // pred_check_branch
          %261 = sbr.rel (%p259) target = $region44
        $region43: #{tpu_custom_call.1} parent=27 // pred_region
          %263 = vsyncadd %s255, 0
          %s264 = smul.addr %s26, 2
          %s265 = smul.addr %s264, 8
          %s266 = scalar_lea.hbm %s2, %s265
          %s267 = sshll.u32 %s258, 4
          %s268 = int_to_ptr.vmem [resolvable:$true] %s267
          %s269 = sshll.u32 %s266, 4
          %s270 = int_to_ptr.hbm [resolvable:$true] %s269
          %275 = dma.vmem_to_hbm [thread:$0]  %s268, 256, %s270, %s255, 128, 128, 8
        $region44: #{tpu_custom_call.1} parent=27 // pred_fallthru
          _
      $region28: #{tpu_custom_call.1} parent=5 // pred_fallthru
        _
      %p276 = scmp.le.s32.totalorder 2, %s17
      // Predicated region
      $region45: #{tpu_custom_call.1} parent=5 // pred_check
        %p277 = pneg %p276
      $region46: #{tpu_custom_call.1} parent=5 // pred_check_branch
        %279 = sbr.rel (%p277) target = $region48
      $region47: #{tpu_custom_call.1} parent=5 // pred_region
        %s280 = ssub.s32 %s17, 2
        // Predicated region
        $region49: #{tpu_custom_call.1} parent=47 // pred_check
          %p281 = pneg %p114
        $region50: #{tpu_custom_call.1} parent=47 // pred_check_branch
          %283 = sbr.rel (%p281) target = $region52
        $region51: #{tpu_custom_call.1} parent=47 // pred_region
          %s284 = sand.u32 %s99, 1
          %s285 = scalar_lea.sflag [#allocation4], %s284
          %s286 = sand.u32 %s99, 1
          %s287 = smul.addr %s286, 16
          %s288 = scalar_lea.vmem [#allocation7], %s287
          %290 = dma.done %s285, 256
        $region52: #{tpu_custom_call.1} parent=47 // pred_fallthru
          _
      $region48: #{tpu_custom_call.1} parent=5 // pred_fallthru
        _
    $region6: #{tpu_custom_call.1} parent=1 // loop_footer
      %s21 = sadd.s32 1, %s17
    $region7: #{tpu_custom_call.1} parent=1 // loop_footer_branch
      %16 = sbr.rel target = $region3
    $region8: #{tpu_custom_call.1} parent=1 // loop_exit
      _
    %291 = vsyncpa [#allocation3], 1
    %s292 = scalar_lea.sflag [#allocation3], 1
    %293 = vsyncpa %s292, 1
    %294 = vsyncpa [#allocation6], 1
    %s295 = scalar_lea.sflag [#allocation6], 1
    %296 = vsyncpa %s295, 1
    %297 = vsyncpa [#allocation4], 1
    %s298 = scalar_lea.sflag [#allocation4], 1
    %299 = vsyncpa %s298, 1

</llo_original>
